<compile_context>
chip_gen: v5e
topology: v5e:2x2
jax: 0.10.0
libtpu: 0.0.40
codegen_flags: <defaults>
</compile_context>

<pallas_src>
import functools

import jax
import jax.numpy as jnp
from jax.experimental import pallas as pl
from jax.experimental.pallas import tpu as pltpu


_LANE = 128
_TM = 512                  # row tile (parallel axis)
_SMALL_N_PAD = 2048        # fused fast-path threshold (A bf16 <= 8 MiB)
_Z_RESIDENT_MAX_N_PAD = 65536   # resident Z <= 16 MiB bf16


def _round_up(v, m):
    return ((v + m - 1) // m) * m


def padded_num_nodes(n, *, force_tiled=False):
    """Padded node count: lane-rounded for the fused fast path, tile-rounded
    (multiple of _TM) for the tiled path.  Padding up beats shrinking tiles."""
    n128 = _round_up(n, _LANE)
    if not force_tiled and n128 <= _SMALL_N_PAD:
        return n128
    return _round_up(n, _TM)


def _pick_tk(n_pad):
    for tk in (2048, 1024, 512):
        if n_pad % tk == 0:
            return tk
    return _LANE  # unreachable: tiled-path n_pad is always a multiple of 512


def _vmem_limit(needed_bytes):
    # Sized from the actual buffer budget (+8 MiB margin), capped at 56 MiB so
    # it is legal on v7x (64 MiB / TensorCore) as well as v5e/v6e (128 MiB).
    return int(min(56 << 20, max(32 << 20, needed_bytes + (8 << 20))))


# ----------------------------------------------------------------------------
# Tiled path: out = A @ Z + b (+ optional ReLU), Z precomputed & VMEM-resident.
# ----------------------------------------------------------------------------
def _a_times_z_kernel(a_ref, z_ref, b_ref, out_ref, acc_ref, *,
                      tk, z_resident, apply_relu):
    k = pl.program_id(1)
    nk = pl.num_programs(1)

    @pl.when(k == 0)
    def _():
        acc_ref[...] = jnp.zeros_like(acc_ref)

    if z_resident:
        start = pl.multiple_of(k * tk, tk)
        z = z_ref[pl.ds(start, tk), :]          # slice the resident Z (no DMA)
    else:
        z = z_ref[...]                          # streamed (tk, D) block

    # Main O(N^2) work: bf16 MXU matmul, f32 accumulation in VMEM scratch.
    acc_ref[...] += jnp.dot(a_ref[...], z, preferred_element_type=jnp.float32)

    @pl.when(k == nk - 1)
    def _():
        y = acc_ref[...] + b_ref[...]
        if apply_relu:
            y = jnp.maximum(y, 0.0)
        out_ref[...] = y.astype(out_ref.dtype)


def _gcn_aggregate(a_p, z, b, *, apply_relu, out_dtype, tm, tk, z_resident):
    """a_p: (n_pad, n_pad) bf16, z: (n_pad, D) bf16, b: (1, D) f32 -> (n_pad, D)."""
    n_pad, d_out = z.shape
    grid = (n_pad // tm, n_pad // tk)

    kernel = functools.partial(_a_times_z_kernel, tk=tk,
                               z_resident=z_resident, apply_relu=apply_relu)

    if z_resident:
        z_spec = pl.BlockSpec((n_pad, d_out), lambda i, k: (0, 0))   # DMA'd once
        z_bytes = 2 * n_pad * d_out * 2
    else:
        z_spec = pl.BlockSpec((tk, d_out), lambda i, k: (k, 0))
        z_bytes = 2 * tk * d_out * 2

    needed = (2 * tm * tk * 2                    # A tile, double-buffered
              + z_bytes
              + 2 * tm * d_out * jnp.dtype(out_dtype).itemsize
              + tm * d_out * 4                   # f32 accumulator
              + 2 * d_out * 4)

    return pl.pallas_call(
        kernel,
        out_shape=jax.ShapeDtypeStruct((n_pad, d_out), out_dtype),
        grid_spec=pltpu.PrefetchScalarGridSpec(
            num_scalar_prefetch=0,
            grid=grid,
            in_specs=[
                pl.BlockSpec((tm, tk), lambda i, k: (i, k)),       # A row/K tile
                z_spec,                                            # Z
                pl.BlockSpec((1, d_out), lambda i, k: (0, 0)),     # bias
            ],
            out_specs=pl.BlockSpec((tm, d_out), lambda i, k: (i, 0)),
            scratch_shapes=[pltpu.VMEM((tm, d_out), jnp.float32)],
        ),
        compiler_params=pltpu.CompilerParams(
            dimension_semantics=("parallel", "arbitrary"),
            vmem_limit_bytes=_vmem_limit(needed),
        ),
    )(a_p, z, b)


# ----------------------------------------------------------------------------
# Small-graph fast path: both layers fused, A held resident in VMEM (read once).
# ----------------------------------------------------------------------------
def _fused_small_kernel(a_ref, z1_ref, w2_ref, b1_ref, b2_ref, out_ref):
    a = a_ref[...]                                              # (N, N) bf16
    # Layer 1: H = relu(A @ Z1 + b1); eval-mode dropout == identity.
    h = jnp.dot(a, z1_ref[...], preferred_element_type=jnp.float32) + b1_ref[...]
    h = jnp.maximum(h, 0.0).astype(jnp.bfloat16)
    # Layer 2: feature transform + aggregation; A reused from VMEM.
    z2 = jnp.dot(h, w2_ref[...], preferred_element_type=jnp.float32)
    out = jnp.dot(a, z2.astype(jnp.bfloat16),
                  preferred_element_type=jnp.float32) + b2_ref[...]
    out_ref[...] = out.astype(out_ref.dtype)


def _fused_small(a_p, z1, w2_bf16, b1_p, b2_p):
    n_pad = a_p.shape[0]
    d1_pad = z1.shape[1]
    c_pad = w2_bf16.shape[1]
    needed = (2 * n_pad * n_pad * 2            # A (assume double-buffered)
              + 2 * n_pad * d1_pad * 2         # Z1
              + 2 * n_pad * c_pad * 4          # output
              + 4 * n_pad * max(d1_pad, c_pad) * 4)   # f32 temporaries
    return pl.pallas_call(
        _fused_small_kernel,
        out_shape=jax.ShapeDtypeStruct((n_pad, c_pad), jnp.float32),
        grid_spec=pltpu.PrefetchScalarGridSpec(
            num_scalar_prefetch=0,
            grid=(1,),
            in_specs=[
                pl.BlockSpec((n_pad, n_pad), lambda i: (0, 0)),
                pl.BlockSpec((n_pad, d1_pad), lambda i: (0, 0)),
                pl.BlockSpec((d1_pad, c_pad), lambda i: (0, 0)),
                pl.BlockSpec((1, d1_pad), lambda i: (0, 0)),
                pl.BlockSpec((1, c_pad), lambda i: (0, 0)),
            ],
            out_specs=pl.BlockSpec((n_pad, c_pad), lambda i: (0, 0)),
        ),
        compiler_params=pltpu.CompilerParams(
            dimension_semantics=("arbitrary",),
            vmem_limit_bytes=_vmem_limit(needed),
        ),
    )(a_p, z1, w2_bf16, b1_p, b2_p)


# ----------------------------------------------------------------------------
# Forward pass (eval mode): conv1 -> relu -> dropout(identity) -> conv2
# ----------------------------------------------------------------------------
def net1_forward(a_hat_p, x, w1, b1, w2, b2, *, force_tiled=False):
    """a_hat_p: (n_pad, n_pad) bf16 pre-padded normalized adjacency (build it
    once with build_gcn_adjacency / padded_num_nodes -- no N^2 pad+cast here).
    x: (N, F) f32, w1: (F, d1), b1: (1, d1), w2: (d1, C), b2: (1, C)."""
    n_pad = a_hat_p.shape[0]
    n, f = x.shape
    d1 = w1.shape[1]
    c = w2.shape[1]
    d1_pad = _round_up(d1, _LANE)
    c_pad = _round_up(c, _LANE)

    # Tiny per-node / per-feature operands: pad to 128-lane widths (zeros in the
    # padding are exact because A's padded columns are zero).
    x_p = jnp.zeros((n_pad, f), jnp.float32).at[:n].set(x.astype(jnp.float32))
    w1_p = jnp.zeros((f, d1_pad), jnp.float32).at[:, :d1].set(w1)
    b1_p = jnp.zeros((1, d1_pad), jnp.float32).at[:, :d1].set(b1)
    w2_p = jnp.zeros((d1_pad, c_pad), jnp.float32).at[:d1, :c].set(w2)
    b2_p = jnp.zeros((1, c_pad), jnp.float32).at[:, :c].set(b2)
    w2_bf16 = w2_p.astype(jnp.bfloat16)

    # Hoisted layer-1 feature transform (O(N*F*128): negligible next to A @ Z).
    z1 = jnp.dot(x_p, w1_p, preferred_element_type=jnp.float32).astype(jnp.bfloat16)

    if not force_tiled and n_pad <= _SMALL_N_PAD:
        out = _fused_small(a_hat_p, z1, w2_bf16, b1_p, b2_p)
    else:
        assert n_pad % _TM == 0, "pad A with padded_num_nodes(n, force_tiled=True)"
        tm = _TM
        tk = _pick_tk(n_pad)
        z_res = n_pad <= _Z_RESIDENT_MAX_N_PAD
        # Layer 1: H = relu(A @ Z1 + b1)  (dropout identity in eval mode).
        h = _gcn_aggregate(a_hat_p, z1, b1_p, apply_relu=True,
                           out_dtype=jnp.bfloat16, tm=tm, tk=tk, z_resident=z_res)
        # Hoisted layer-2 feature transform.
        z2 = jnp.dot(h, w2_bf16,
                     preferred_element_type=jnp.float32).astype(jnp.bfloat16)
        # Layer 2: out = A @ Z2 + b2.
        out = _gcn_aggregate(a_hat_p, z2, b2_p, apply_relu=False,
                             out_dtype=jnp.float32, tm=tm, tk=tk, z_resident=z_res)
    return out[:n, :c]


def build_gcn_adjacency(edge_index, num_nodes, n_pad=None, dtype=jnp.bfloat16):
    """Dense symmetric-normalized adjacency with self-loops (GCNConv's gcn_norm),
    built directly at the padded size / storage dtype (padded rows & cols are
    zero, which keeps the padded-node rows of H harmless)."""
    if n_pad is None:
        n_pad = num_nodes
    src = edge_index[0]
    tgt = edge_index[1]
    loops = jnp.arange(num_nodes, dtype=edge_index.dtype)
    src = jnp.concatenate([src, loops])
    tgt = jnp.concatenate([tgt, loops])
    ones = jnp.ones(src.shape[0], jnp.float32)
    deg = jnp.zeros((num_nodes,), jnp.float32).at[tgt].add(ones)
    deg_inv_sqrt = jnp.where(deg > 0, 1.0 / jnp.sqrt(deg), 0.0)
    norm = deg_inv_sqrt[src] * deg_inv_sqrt[tgt]
    a = jnp.zeros((n_pad, n_pad), jnp.float32).at[tgt, src].add(norm)
    return a.astype(dtype)


if __name__ == "__main__":
    key = jax.random.PRNGKey(0)

    # Module defaults: d1=16, num_features=1, num_classes=1
    d1, num_features, num_classes = 16, 1, 1
    num_nodes = 16

    k_x, k_w1, k_w2 = jax.random.split(key, 3)

    # node features (data.x): (N, num_features)
    x = jax.random.normal(k_x, (num_nodes, num_features), dtype=jnp.float32)

    # edge_index (data.edge_index): undirected ring over 16 nodes, (2, E)
    src = jnp.arange(num_nodes, dtype=jnp.int32)
    dst = (src + 1) % num_nodes
    edge_index = jnp.stack(
        [jnp.concatenate([src, dst]), jnp.concatenate([dst, src])], axis=0
    )

    # Deterministic parameter init (glorot-ish scale), biases zero like GCNConv.
    w1 = jax.random.normal(k_w1, (num_features, d1), dtype=jnp.float32) * (
        1.0 / jnp.sqrt(jnp.float32(num_features)))
    b1 = jnp.zeros((1, d1), dtype=jnp.float32)
    w2 = jax.random.normal(k_w2, (d1, num_classes), dtype=jnp.float32) * (
        1.0 / jnp.sqrt(jnp.float32(d1)))
    b2 = jnp.zeros((1, num_classes), dtype=jnp.float32)

    # Plain-JAX f32 reference (unpadded).
    a_ref_f32 = build_gcn_adjacency(edge_index, num_nodes,
                                    n_pad=num_nodes, dtype=jnp.float32)
    ref_h = jnp.maximum(a_ref_f32 @ (x @ w1) + b1, 0.0)
    ref = a_ref_f32 @ (ref_h @ w2) + b2

    # Fast path: fused single pallas_call, A resident in VMEM.
    n_pad_small = padded_num_nodes(num_nodes)
    a_small = build_gcn_adjacency(edge_index, num_nodes, n_pad=n_pad_small)
    out_fused = jax.block_until_ready(net1_forward(a_small, x, w1, b1, w2, b2))

    # Tiled / streamed path: exercised here too so both code paths are verified.
    n_pad_big = padded_num_nodes(num_nodes, force_tiled=True)
    a_big = build_gcn_adjacency(edge_index, num_nodes, n_pad=n_pad_big)
    out_tiled = jax.block_until_ready(
        net1_forward(a_big, x, w1, b1, w2, b2, force_tiled=True))

    for out in (out_fused, out_tiled):
        assert out.shape == (num_nodes, num_classes)
        assert jnp.allclose(out, ref, atol=3e-2, rtol=3e-2), (
            f"max abs err {jnp.max(jnp.abs(out - ref))}")

    print("KERNEL_OK")
</pallas_src>

<mosaic_0001>
module attributes {stable_mosaic.version = 11 : i64} {
  func.func @_fused_small_kernel(%arg0: i32, %arg1: memref<128x128xbf16, #tpu.memory_space<vmem>>, %arg2: memref<128x128xbf16, #tpu.memory_space<vmem>>, %arg3: memref<128x128xbf16, #tpu.memory_space<vmem>>, %arg4: memref<1x128xf32, #tpu.memory_space<vmem>>, %arg5: memref<1x128xf32, #tpu.memory_space<vmem>>, %arg6: memref<128x128xf32, #tpu.memory_space<vmem>>) attributes {dimension_semantics = [#tpu.dimension_semantics<arbitrary>], iteration_bounds = array<i64: 1>, scalar_prefetch = 0 : i64, scratch_operands = 0 : i64, tpu.core_type = #tpu.core_type<tc>, window_params = [{pipeline_mode = #tpu.pipeline_mode<synchronous>, transform_indices = @transform_0, window_bounds = array<i64: 128, 128>}, {pipeline_mode = #tpu.pipeline_mode<synchronous>, transform_indices = @transform_1, window_bounds = array<i64: 128, 128>}, {pipeline_mode = #tpu.pipeline_mode<synchronous>, transform_indices = @transform_2, window_bounds = array<i64: 128, 128>}, {pipeline_mode = #tpu.pipeline_mode<synchronous>, transform_indices = @transform_3, window_bounds = array<i64: 1, 128>}, {pipeline_mode = #tpu.pipeline_mode<synchronous>, transform_indices = @transform_4, window_bounds = array<i64: 1, 128>}, {pipeline_mode = #tpu.pipeline_mode<synchronous>, transform_indices = @transform_5, window_bounds = array<i64: 128, 128>}]} {
    %c0 = arith.constant 0 : index
    %c0_0 = arith.constant 0 : index
    %0 = vector.load %arg1[%c0, %c0_0] : memref<128x128xbf16, #tpu.memory_space<vmem>>, vector<128x128xbf16>
    %c0_1 = arith.constant 0 : index
    %c0_2 = arith.constant 0 : index
    %1 = vector.load %arg2[%c0_1, %c0_2] : memref<128x128xbf16, #tpu.memory_space<vmem>>, vector<128x128xbf16>
    %cst = arith.constant dense<0.000000e+00> : vector<128x128xf32>
    %2 = tpu.matmul %0, %1, %cst {dimension_numbers = #tpu.dot_dimension_numbers<[1], [0], [0], [1], [0, 0, 1, 1], [], []>} : vector<128x128xbf16>, vector<128x128xbf16>, vector<128x128xf32> -> vector<128x128xf32>
    %c0_3 = arith.constant 0 : index
    %c0_4 = arith.constant 0 : index
    %3 = vector.load %arg4[%c0_3, %c0_4] : memref<1x128xf32, #tpu.memory_space<vmem>>, vector<1x128xf32>
    %4 = vector.broadcast %3 : vector<1x128xf32> to vector<128x128xf32>
    %5 = arith.addf %2, %4 : vector<128x128xf32>
    %cst_5 = arith.constant 0.000000e+00 : f32
    %6 = vector.broadcast %cst_5 : f32 to vector<128x128xf32>
    %7 = arith.maximumf %5, %6 : vector<128x128xf32>
    %8 = arith.truncf %7 : vector<128x128xf32> to vector<128x128xbf16>
    %c0_6 = arith.constant 0 : index
    %c0_7 = arith.constant 0 : index
    %9 = vector.load %arg3[%c0_6, %c0_7] : memref<128x128xbf16, #tpu.memory_space<vmem>>, vector<128x128xbf16>
    %cst_8 = arith.constant dense<0.000000e+00> : vector<128x128xf32>
    %10 = tpu.matmul %8, %9, %cst_8 {dimension_numbers = #tpu.dot_dimension_numbers<[1], [0], [0], [1], [0, 0, 1, 1], [], []>} : vector<128x128xbf16>, vector<128x128xbf16>, vector<128x128xf32> -> vector<128x128xf32>
    %11 = arith.truncf %10 : vector<128x128xf32> to vector<128x128xbf16>
    %cst_9 = arith.constant dense<0.000000e+00> : vector<128x128xf32>
    %12 = tpu.matmul %0, %11, %cst_9 {dimension_numbers = #tpu.dot_dimension_numbers<[1], [0], [0], [1], [0, 0, 1, 1], [], []>} : vector<128x128xbf16>, vector<128x128xbf16>, vector<128x128xf32> -> vector<128x128xf32>
    %c0_10 = arith.constant 0 : index
    %c0_11 = arith.constant 0 : index
    %13 = vector.load %arg5[%c0_10, %c0_11] : memref<1x128xf32, #tpu.memory_space<vmem>>, vector<1x128xf32>
    %14 = vector.broadcast %13 : vector<1x128xf32> to vector<128x128xf32>
    %15 = arith.addf %12, %14 : vector<128x128xf32>
    %c0_12 = arith.constant 0 : index
    %c0_13 = arith.constant 0 : index
    %16 = vector.load %arg6[%c0_12, %c0_13] : memref<128x128xf32, #tpu.memory_space<vmem>>, vector<128x128xf32>
    tpu.vector_store %arg6[%c0_12, %c0_13], %15 {strides = array<i32>} : memref<128x128xf32, #tpu.memory_space<vmem>>, vector<128x128xf32>,
    return
  }
  func.func @transform_0(%arg0: i32) -> (i32, i32) {
    %c0_i32 = arith.constant 0 : i32
    %c0_i32_0 = arith.constant 0 : i32
    %c0_i32_1 = arith.constant 0 : i32
    return %c0_i32, %c0_i32_0 : i32, i32
  }
  func.func @transform_1(%arg0: i32) -> (i32, i32) {
    %c0_i32 = arith.constant 0 : i32
    %c0_i32_0 = arith.constant 0 : i32
    %c0_i32_1 = arith.constant 0 : i32
    return %c0_i32, %c0_i32_0 : i32, i32
  }
  func.func @transform_2(%arg0: i32) -> (i32, i32) {
    %c0_i32 = arith.constant 0 : i32
    %c0_i32_0 = arith.constant 0 : i32
    %c0_i32_1 = arith.constant 0 : i32
    return %c0_i32, %c0_i32_0 : i32, i32
  }
  func.func @transform_3(%arg0: i32) -> (i32, i32) {
    %c0_i32 = arith.constant 0 : i32
    %c0_i32_0 = arith.constant 0 : i32
    %c0_i32_1 = arith.constant 0 : i32
    return %c0_i32, %c0_i32_0 : i32, i32
  }
  func.func @transform_4(%arg0: i32) -> (i32, i32) {
    %c0_i32 = arith.constant 0 : i32
    %c0_i32_0 = arith.constant 0 : i32
    %c0_i32_1 = arith.constant 0 : i32
    return %c0_i32, %c0_i32_0 : i32, i32
  }
  func.func @transform_5(%arg0: i32) -> (i32, i32) {
    %c0_i32 = arith.constant 0 : i32
    %c0_i32_0 = arith.constant 0 : i32
    %c0_i32_1 = arith.constant 0 : i32
    return %c0_i32, %c0_i32_0 : i32, i32
  }
}

</mosaic_0001>

<llo_original>
// kernel: tpu_custom_call.1
$region0: #{tpu_custom_call.1}
  #allocation0 [shape = 'u32[]', space=smem, size = 0x4, offset = 0x4, fixed_abs, tag = 'smem constant byte address 0x4 - core index']
  #allocation1 [shape = 'u32[72,128]{1,0:T(1,128)}', space=vmem, size = 0x9000, scoped, tag = 'internal scratch']
  %s0 = inlined_call_operand.hbm [shape: bf16[128,128], index: 0, kind: input, shape index: {}]
  %s1 = inlined_call_operand.hbm [shape: bf16[128,128], index: 1, kind: input, shape index: {}]
  %s2 = inlined_call_operand.hbm [shape: bf16[128,128], index: 2, kind: input, shape index: {}]
  %s3 = inlined_call_operand.vmem [shape: f32[1,128], index: 3, kind: input, shape index: {}]
  %s4 = inlined_call_operand.vmem [shape: f32[1,128], index: 4, kind: input, shape index: {}]
  %s5 = inlined_call_operand.hbm [shape: f32[128,128], index: 5, kind: output, shape index: {}]
  %s6 = sld [smem:[#allocation0]]
  $region42: #{tpu_custom_call.1} parent=0
    _
  %s8 = ssub.s32 1, %s6
  %s9 = scalar_select 0, %s8, %s6
  $region1: #{tpu_custom_call.1} parent=0
    #allocation2 [shape = 'u8[32768]{0}', space=vmem, size = 0x8000, scoped, tag = 'input window, operand 0, single buffered']
    #allocation3 [shape = 's32[1]{0}', space=sflag, size = 0x4, scoped, tag = 'scoped memory for tpu_custom_call.1']
    #allocation4 [shape = 's32[1]{0}', space=sflag, size = 0x4, scoped, tag = 'scoped memory for tpu_custom_call.1']
    #allocation5 [shape = 'u8[32768]{0}', space=vmem, size = 0x8000, scoped, tag = 'input window, operand 1, single buffered']
    #allocation6 [shape = 's32[1]{0}', space=sflag, size = 0x4, scoped, tag = 'scoped memory for tpu_custom_call.1']
    #allocation7 [shape = 'u8[32768]{0}', space=vmem, size = 0x8000, scoped, tag = 'input window, operand 2, single buffered']
    #allocation8 [shape = 'u8[65536]{0}', space=vmem, size = 0x10000, scoped, tag = 'output window, operand 0, single buffered']
    %10 = vsyncpa [#allocation3], 0
    %11 = vsyncpa [#allocation6], 0
    %12 = vsyncpa [#allocation4], 0
    // Predicated region
    $region2: #{tpu_custom_call.1} parent=1 // pred_check
      _
    $region3: #{tpu_custom_call.1} parent=1 // pred_check_branch
      %14 = sbr.rel (0) target = $region5
    $region4: #{tpu_custom_call.1} parent=1 // pred_region
      %16 = vsyncadd [#allocation3], 0
      %s17 = sshll.u32 %s0, 4
      %s18 = int_to_ptr.hbm [resolvable:$true] %s17
      %s19 = sshll.u32 [#allocation2], 4
      %s20 = int_to_ptr.vmem [resolvable:$true] %s19
      %25 = dma.hbm_to_vmem [thread:$0]  %s18, 1024, %s20, [#allocation3], 64, 64, 4
    $region5: #{tpu_custom_call.1} parent=1 // pred_fallthru
      _
    // Predicated region
    $region6: #{tpu_custom_call.1} parent=1 // pred_check
      _
    $region7: #{tpu_custom_call.1} parent=1 // pred_check_branch
      %27 = sbr.rel (0) target = $region9
    $region8: #{tpu_custom_call.1} parent=1 // pred_region
      %29 = vsyncadd [#allocation6], 0
      %s30 = sshll.u32 %s1, 4
      %s31 = int_to_ptr.hbm [resolvable:$true] %s30
      %s32 = sshll.u32 [#allocation5], 4
      %s33 = int_to_ptr.vmem [resolvable:$true] %s32
      %38 = dma.hbm_to_vmem [thread:$0]  %s31, 1024, %s33, [#allocation6], 64, 64, 4
    $region9: #{tpu_custom_call.1} parent=1 // pred_fallthru
      _
    // Predicated region
    $region10: #{tpu_custom_call.1} parent=1 // pred_check
      _
    $region11: #{tpu_custom_call.1} parent=1 // pred_check_branch
      %40 = sbr.rel (0) target = $region13
    $region12: #{tpu_custom_call.1} parent=1 // pred_region
      %42 = vsyncadd [#allocation6], 0
      %s43 = sshll.u32 %s2, 4
      %s44 = int_to_ptr.hbm [resolvable:$true] %s43
      %s45 = sshll.u32 [#allocation7], 4
      %s46 = int_to_ptr.vmem [resolvable:$true] %s45
      %51 = dma.hbm_to_vmem [thread:$0]  %s44, 1024, %s46, [#allocation6], 64, 64, 4
    $region13: #{tpu_custom_call.1} parent=1 // pred_fallthru
      _
    // Predicated region
    $region14: #{tpu_custom_call.1} parent=1 // pred_check
      _
    $region15: #{tpu_custom_call.1} parent=1 // pred_check_branch
      %53 = sbr.rel (0) target = $region17
    $region16: #{tpu_custom_call.1} parent=1 // pred_region
      _
    $region17: #{tpu_custom_call.1} parent=1 // pred_fallthru
      _
    // Predicated region
    $region18: #{tpu_custom_call.1} parent=1 // pred_check
      _
    $region19: #{tpu_custom_call.1} parent=1 // pred_check_branch
      %55 = sbr.rel (0) target = $region21
    $region20: #{tpu_custom_call.1} parent=1 // pred_region
      _
    $region21: #{tpu_custom_call.1} parent=1 // pred_fallthru
      _
    // Predicated region
    $region22: #{tpu_custom_call.1} parent=1 // pred_check
      _
    $region23: #{tpu_custom_call.1} parent=1 // pred_check_branch
      %57 = sbr.rel (0) target = $region25
    $region24: #{tpu_custom_call.1} parent=1 // pred_region
      %59 = dma.done [#allocation3], 1024
    $region25: #{tpu_custom_call.1} parent=1 // pred_fallthru
      _
    // Predicated region
    $region26: #{tpu_custom_call.1} parent=1 // pred_check
      _
    $region27: #{tpu_custom_call.1} parent=1 // pred_check_branch
      %61 = sbr.rel (0) target = $region29
    $region28: #{tpu_custom_call.1} parent=1 // pred_region
      %63 = dma.done [#allocation6], 1024
    $region29: #{tpu_custom_call.1} parent=1 // pred_fallthru
      _
    // Predicated region
    $region30: #{tpu_custom_call.1} parent=1 // pred_check
      _
    $region31: #{tpu_custom_call.1} parent=1 // pred_check_branch
      %65 = sbr.rel (0) target = $region33
    $region32: #{tpu_custom_call.1} parent=1 // pred_region
      %67 = dma.done [#allocation6], 1024
    $region33: #{tpu_custom_call.1} parent=1 // pred_fallthru
      _
    %v68 = vld [vmem:[#allocation2] sm:$0xf]
    %v69 = vld [vmem:[#allocation2 + $0x4] sm:$0xf]
    %v70 = vld [vmem:[#allocation2 + $0x8] sm:$0xf]
    %v71 = vld [vmem:[#allocation2 + $0xc] sm:$0xf]
    %v72 = vld [vmem:[#allocation2 + $0x10] sm:$0xf]
    %v73 = vld [vmem:[#allocation2 + $0x14] sm:$0xf]
    %v74 = vld [vmem:[#allocation2 + $0x18] sm:$0xf]
    %v75 = vld [vmem:[#allocation2 + $0x1c] sm:$0xf]
    %v76 = vld [vmem:[#allocation2 + $0x20] sm:$0xf]
    %v77 = vld [vmem:[#allocation2 + $0x24] sm:$0xf]
    %v78 = vld [vmem:[#allocation2 + $0x28] sm:$0xf]
    %v79 = vld [vmem:[#allocation2 + $0x2c] sm:$0xf]
    %v80 = vld [vmem:[#allocation2 + $0x30] sm:$0xf]
    %v81 = vld [vmem:[#allocation2 + $0x34] sm:$0xf]
    %v82 = vld [vmem:[#allocation2 + $0x38] sm:$0xf]
    %v83 = vld [vmem:[#allocation2 + $0x3c] sm:$0xf]
    %v84 = vld [vmem:[#allocation5] sm:$0xf]
    %v85 = vld [vmem:[#allocation5 + $0x4] sm:$0xf]
    %v86 = vld [vmem:[#allocation5 + $0x8] sm:$0xf]
    %v87 = vld [vmem:[#allocation5 + $0xc] sm:$0xf]
    %v88 = vld [vmem:[#allocation5 + $0x10] sm:$0xf]
    %v89 = vld [vmem:[#allocation5 + $0x14] sm:$0xf]
    %v90 = vld [vmem:[#allocation5 + $0x18] sm:$0xf]
    %v91 = vld [vmem:[#allocation5 + $0x1c] sm:$0xf]
    %v92 = vld [vmem:[#allocation5 + $0x20] sm:$0xf]
    %v93 = vld [vmem:[#allocation5 + $0x24] sm:$0xf]
    %v94 = vld [vmem:[#allocation5 + $0x28] sm:$0xf]
    %v95 = vld [vmem:[#allocation5 + $0x2c] sm:$0xf]
    %v96 = vld [vmem:[#allocation5 + $0x30] sm:$0xf]
    %v97 = vld [vmem:[#allocation5 + $0x34] sm:$0xf]
    %v98 = vld [vmem:[#allocation5 + $0x38] sm:$0xf]
    %v99 = vld [vmem:[#allocation5 + $0x3c] sm:$0xf]
    %v100 = vld [vmem:[%s3] sm:$0x1]
    %v102 = vperm.slane %v100, 0
    %v120 = vunpack.c.l.b16 %v68
    %v121 = vunpack.c.l.b16 %v69
    %v122 = vunpack.c.l.b16 %v70
    %v123 = vunpack.c.l.b16 %v71
    %v124 = vunpack.c.l.b16 %v72
    %v125 = vunpack.c.l.b16 %v73
    %v126 = vunpack.c.l.b16 %v74
    %v127 = vunpack.c.l.b16 %v75
    %v128 = vunpack.c.l.b16 %v76
    %v129 = vunpack.c.l.b16 %v77
    %v130 = vunpack.c.l.b16 %v78
    %v131 = vunpack.c.l.b16 %v79
    %v132 = vunpack.c.l.b16 %v80
    %v133 = vunpack.c.l.b16 %v81
    %v134 = vunpack.c.l.b16 %v82
    %v135 = vunpack.c.l.b16 %v83
    %v136 = vpack.c.b16 %v121, %v120
    %v137 = vpack.c.b16 %v123, %v122
    %v138 = vpack.c.b16 %v125, %v124
    %v139 = vpack.c.b16 %v127, %v126
    %v140 = vpack.c.b16 %v129, %v128
    %v141 = vpack.c.b16 %v131, %v130
    %v142 = vpack.c.b16 %v133, %v132
    %v143 = vpack.c.b16 %v135, %v134
    %v168 = vunpack.c.l.b16 %v84
    %v169 = vunpack.c.l.b16 %v85
    %v170 = vunpack.c.l.b16 %v86
    %v171 = vunpack.c.l.b16 %v87
    %v172 = vunpack.c.l.b16 %v88
    %v173 = vunpack.c.l.b16 %v89
    %v174 = vunpack.c.l.b16 %v90
    %v175 = vunpack.c.l.b16 %v91
    %v176 = vunpack.c.l.b16 %v92
    %v177 = vunpack.c.l.b16 %v93
    %v178 = vunpack.c.l.b16 %v94
    %v179 = vunpack.c.l.b16 %v95
    %v180 = vunpack.c.l.b16 %v96
    %v181 = vunpack.c.l.b16 %v97
    %v182 = vunpack.c.l.b16 %v98
    %v183 = vunpack.c.l.b16 %v99
    %v184 = vpack.c.b16 %v169, %v168
    %v185 = vpack.c.b16 %v171, %v170
    %v186 = vpack.c.b16 %v173, %v172
    %v187 = vpack.c.b16 %v175, %v174
    %v188 = vpack.c.b16 %v177, %v176
    %v189 = vpack.c.b16 %v179, %v178
    %v190 = vpack.c.b16 %v181, %v180
    %v191 = vpack.c.b16 %v183, %v182
    %200 = vmatpush.bf16.msra.mxu0 %v191
    %201 = vmatpush.bf16.msra.mxu0 %v190
    %202 = vmatpush.bf16.msra.mxu0 %v189
    %203 = vmatpush.bf16.msra.mxu0 %v188
    %204 = vmatpush.bf16.msra.mxu0 %v187
    %205 = vmatpush.bf16.msra.mxu0 %v186
    %206 = vmatpush.bf16.msra.mxu0 %v185
    %207 = vmatpush.bf16.msra.mxu0 %v184
    %208 = vmatmul.bf16.gmra.mxu0 %v136
    %v209 = vpop.f32.mrf.mxu0
    %v210 = vadd.f32 %v102, %v209
    %v211 = vpop.f32.mrf.mxu0
    %v212 = vadd.f32 %v102, %v211
    %213 = vmatmul.bf16.gmra.mxu0 %v137
    %v214 = vpop.f32.mrf.mxu0
    %v215 = vadd.f32 %v102, %v214
    %v216 = vpop.f32.mrf.mxu0
    %v217 = vadd.f32 %v102, %v216
    %218 = vmatmul.bf16.gmra.mxu0 %v138
    %v219 = vpop.f32.mrf.mxu0
    %v220 = vadd.f32 %v102, %v219
    %v221 = vpop.f32.mrf.mxu0
    %v222 = vadd.f32 %v102, %v221
    %223 = vmatmul.bf16.gmra.mxu0 %v139
    %v224 = vpop.f32.mrf.mxu0
    %v225 = vadd.f32 %v102, %v224
    %v226 = vpop.f32.mrf.mxu0
    %v227 = vadd.f32 %v102, %v226
    %228 = vmatmul.bf16.gmra.mxu0 %v140
    %v229 = vpop.f32.mrf.mxu0
    %v230 = vadd.f32 %v102, %v229
    %v231 = vpop.f32.mrf.mxu0
    %v232 = vadd.f32 %v102, %v231
    %233 = vmatmul.bf16.gmra.mxu0 %v141
    %v234 = vpop.f32.mrf.mxu0
    %v235 = vadd.f32 %v102, %v234
    %v236 = vpop.f32.mrf.mxu0
    %v237 = vadd.f32 %v102, %v236
    %238 = vmatmul.bf16.gmra.mxu0 %v142
    %v239 = vpop.f32.mrf.mxu0
    %v240 = vadd.f32 %v102, %v239
    %v241 = vpop.f32.mrf.mxu0
    %v242 = vadd.f32 %v102, %v241
    %243 = vmatmul.bf16.gmra.mxu0 %v143
    %v244 = vpop.f32.mrf.mxu0
    %v245 = vadd.f32 %v102, %v244
    %v246 = vpop.f32.mrf.mxu0
    %v247 = vadd.f32 %v102, %v246
    %248 = vdwg.mxu0
    %v249 = vmax.f32 %v210, 0.0
    %v250 = vmax.f32 %v212, 0.0
    %v251 = vmax.f32 %v215, 0.0
    %v252 = vmax.f32 %v217, 0.0
    %v253 = vmax.f32 %v220, 0.0
    %v254 = vmax.f32 %v222, 0.0
    %v255 = vmax.f32 %v225, 0.0
    %v256 = vmax.f32 %v227, 0.0
    %v257 = vmax.f32 %v230, 0.0
    %v258 = vmax.f32 %v232, 0.0
    %v259 = vmax.f32 %v235, 0.0
    %v260 = vmax.f32 %v237, 0.0
    %v261 = vmax.f32 %v240, 0.0
    %v262 = vmax.f32 %v242, 0.0
    %v263 = vmax.f32 %v245, 0.0
    %v264 = vmax.f32 %v247, 0.0
    %v265 = vpack.c.bf16 %v250, %v249
    %v266 = vpack.c.bf16 %v252, %v251
    %v267 = vpack.c.bf16 %v254, %v253
    %v268 = vpack.c.bf16 %v256, %v255
    %v269 = vpack.c.bf16 %v258, %v257
    %v270 = vpack.c.bf16 %v260, %v259
    %v271 = vpack.c.bf16 %v262, %v261
    %v272 = vpack.c.bf16 %v264, %v263
    %v273 = vld [vmem:[#allocation7] sm:$0xf]
    %v274 = vld [vmem:[#allocation7 + $0x4] sm:$0xf]
    %v275 = vld [vmem:[#allocation7 + $0x8] sm:$0xf]
    %v276 = vld [vmem:[#allocation7 + $0xc] sm:$0xf]
    %v277 = vld [vmem:[#allocation7 + $0x10] sm:$0xf]
    %v278 = vld [vmem:[#allocation7 + $0x14] sm:$0xf]
    %v279 = vld [vmem:[#allocation7 + $0x18] sm:$0xf]
    %v280 = vld [vmem:[#allocation7 + $0x1c] sm:$0xf]
    %v281 = vld [vmem:[#allocation7 + $0x20] sm:$0xf]
    %v282 = vld [vmem:[#allocation7 + $0x24] sm:$0xf]
    %v283 = vld [vmem:[#allocation7 + $0x28] sm:$0xf]
    %v284 = vld [vmem:[#allocation7 + $0x2c] sm:$0xf]
    %v285 = vld [vmem:[#allocation7 + $0x30] sm:$0xf]
    %v286 = vld [vmem:[#allocation7 + $0x34] sm:$0xf]
    %v287 = vld [vmem:[#allocation7 + $0x38] sm:$0xf]
    %v288 = vld [vmem:[#allocation7 + $0x3c] sm:$0xf]
    %v305 = vunpack.c.l.b16 %v273
    %v306 = vunpack.c.l.b16 %v274
    %v307 = vunpack.c.l.b16 %v275
    %v308 = vunpack.c.l.b16 %v276
    %v309 = vunpack.c.l.b16 %v277
    %v310 = vunpack.c.l.b16 %v278
    %v311 = vunpack.c.l.b16 %v279
    %v312 = vunpack.c.l.b16 %v280
    %v313 = vunpack.c.l.b16 %v281
    %v314 = vunpack.c.l.b16 %v282
    %v315 = vunpack.c.l.b16 %v283
    %v316 = vunpack.c.l.b16 %v284
    %v317 = vunpack.c.l.b16 %v285
    %v318 = vunpack.c.l.b16 %v286
    %v319 = vunpack.c.l.b16 %v287
    %v320 = vunpack.c.l.b16 %v288
    %v321 = vpack.c.b16 %v306, %v305
    %v322 = vpack.c.b16 %v308, %v307
    %v323 = vpack.c.b16 %v310, %v309
    %v324 = vpack.c.b16 %v312, %v311
    %v325 = vpack.c.b16 %v314, %v313
    %v326 = vpack.c.b16 %v316, %v315
    %v327 = vpack.c.b16 %v318, %v317
    %v328 = vpack.c.b16 %v320, %v319
    %337 = vmatpush.bf16.msra.mxu0 %v328
    %338 = vmatpush.bf16.msra.mxu0 %v327
    %339 = vmatpush.bf16.msra.mxu0 %v326
    %340 = vmatpush.bf16.msra.mxu0 %v325
    %341 = vmatpush.bf16.msra.mxu0 %v324
    %342 = vmatpush.bf16.msra.mxu0 %v323
    %343 = vmatpush.bf16.msra.mxu0 %v322
    %344 = vmatpush.bf16.msra.mxu0 %v321
    %345 = vmatmul.bf16.gmra.mxu0 %v265
    %v346 = vpop.f32.mrf.mxu0
    %v347 = vadd.f32 0.0, %v346
    %v348 = vpop.f32.mrf.mxu0
    %v349 = vadd.f32 0.0, %v348
    %350 = vmatmul.bf16.gmra.mxu0 %v266
    %v351 = vpop.f32.mrf.mxu0
    %v352 = vadd.f32 0.0, %v351
    %v353 = vpop.f32.mrf.mxu0
    %v354 = vadd.f32 0.0, %v353
    %355 = vmatmul.bf16.gmra.mxu0 %v267
    %v356 = vpop.f32.mrf.mxu0
    %v357 = vadd.f32 0.0, %v356
    %v358 = vpop.f32.mrf.mxu0
    %v359 = vadd.f32 0.0, %v358
    %360 = vmatmul.bf16.gmra.mxu0 %v268
    %v361 = vpop.f32.mrf.mxu0
    %v362 = vadd.f32 0.0, %v361
    %v363 = vpop.f32.mrf.mxu0
    %v364 = vadd.f32 0.0, %v363
    %365 = vmatmul.bf16.gmra.mxu0 %v269
    %v366 = vpop.f32.mrf.mxu0
    %v367 = vadd.f32 0.0, %v366
    %v368 = vpop.f32.mrf.mxu0
    %v369 = vadd.f32 0.0, %v368
    %370 = vmatmul.bf16.gmra.mxu0 %v270
    %v371 = vpop.f32.mrf.mxu0
    %v372 = vadd.f32 0.0, %v371
    %v373 = vpop.f32.mrf.mxu0
    %v374 = vadd.f32 0.0, %v373
    %375 = vmatmul.bf16.gmra.mxu0 %v271
    %v376 = vpop.f32.mrf.mxu0
    %v377 = vadd.f32 0.0, %v376
    %v378 = vpop.f32.mrf.mxu0
    %v379 = vadd.f32 0.0, %v378
    %380 = vmatmul.bf16.gmra.mxu0 %v272
    %v381 = vpop.f32.mrf.mxu0
    %v382 = vadd.f32 0.0, %v381
    %v383 = vpop.f32.mrf.mxu0
    %v384 = vadd.f32 0.0, %v383
    %385 = vdwg.mxu0
    %v386 = vpack.c.bf16 %v349, %v347
    %v387 = vpack.c.bf16 %v354, %v352
    %v388 = vpack.c.bf16 %v359, %v357
    %v389 = vpack.c.bf16 %v364, %v362
    %v390 = vpack.c.bf16 %v369, %v367
    %v391 = vpack.c.bf16 %v374, %v372
    %v392 = vpack.c.bf16 %v379, %v377
    %v393 = vpack.c.bf16 %v384, %v382
    %v394 = vld [vmem:[%s4] sm:$0x1]
    %v396 = vperm.slane %v394, 0
    %398 = vmatpush.bf16.msra.mxu0 %v393
    %399 = vmatpush.bf16.msra.mxu0 %v392
    %400 = vmatpush.bf16.msra.mxu0 %v391
    %401 = vmatpush.bf16.msra.mxu0 %v390
    %402 = vmatpush.bf16.msra.mxu0 %v389
    %403 = vmatpush.bf16.msra.mxu0 %v388
    %404 = vmatpush.bf16.msra.mxu0 %v387
    %405 = vmatpush.bf16.msra.mxu0 %v386
    %406 = vmatmul.bf16.gmra.mxu0 %v136
    %v407 = vpop.f32.mrf.mxu0
    %v408 = vadd.f32 %v396, %v407
    %v409 = vpop.f32.mrf.mxu0
    %v410 = vadd.f32 %v396, %v409
    %411 = vmatmul.bf16.gmra.mxu0 %v137
    %v412 = vpop.f32.mrf.mxu0
    %v413 = vadd.f32 %v396, %v412
    %v414 = vpop.f32.mrf.mxu0
    %v415 = vadd.f32 %v396, %v414
    %416 = vmatmul.bf16.gmra.mxu0 %v138
    %v417 = vpop.f32.mrf.mxu0
    %v418 = vadd.f32 %v396, %v417
    %v419 = vpop.f32.mrf.mxu0
    %v420 = vadd.f32 %v396, %v419
    %421 = vmatmul.bf16.gmra.mxu0 %v139
    %v422 = vpop.f32.mrf.mxu0
    %v423 = vadd.f32 %v396, %v422
    %v424 = vpop.f32.mrf.mxu0
    %v425 = vadd.f32 %v396, %v424
    %426 = vmatmul.bf16.gmra.mxu0 %v140
    %v427 = vpop.f32.mrf.mxu0
    %v428 = vadd.f32 %v396, %v427
    %v429 = vpop.f32.mrf.mxu0
    %v430 = vadd.f32 %v396, %v429
    %431 = vmatmul.bf16.gmra.mxu0 %v141
    %v432 = vpop.f32.mrf.mxu0
    %v433 = vadd.f32 %v396, %v432
    %v434 = vpop.f32.mrf.mxu0
    %v435 = vadd.f32 %v396, %v434
    %436 = vmatmul.bf16.gmra.mxu0 %v142
    %v437 = vpop.f32.mrf.mxu0
    %v438 = vadd.f32 %v396, %v437
    %v439 = vpop.f32.mrf.mxu0
    %v440 = vadd.f32 %v396, %v439
    %441 = vmatmul.bf16.gmra.mxu0 %v143
    %v442 = vpop.f32.mrf.mxu0
    %v443 = vadd.f32 %v396, %v442
    %v444 = vpop.f32.mrf.mxu0
    %v445 = vadd.f32 %v396, %v444
    %446 = vdwg.mxu0
    %447 = vst [vmem:[#allocation8] sm:$0xff] %v408
    %448 = vst [vmem:[#allocation8 + $0x8] sm:$0xff] %v410
    %449 = vst [vmem:[#allocation8 + $0x10] sm:$0xff] %v413
    %450 = vst [vmem:[#allocation8 + $0x18] sm:$0xff] %v415
    %451 = vst [vmem:[#allocation8 + $0x20] sm:$0xff] %v418
    %452 = vst [vmem:[#allocation8 + $0x28] sm:$0xff] %v420
    %453 = vst [vmem:[#allocation8 + $0x30] sm:$0xff] %v423
    %454 = vst [vmem:[#allocation8 + $0x38] sm:$0xff] %v425
    %455 = vst [vmem:[#allocation8 + $0x40] sm:$0xff] %v428
    %456 = vst [vmem:[#allocation8 + $0x48] sm:$0xff] %v430
    %457 = vst [vmem:[#allocation8 + $0x50] sm:$0xff] %v433
    %458 = vst [vmem:[#allocation8 + $0x58] sm:$0xff] %v435
    %459 = vst [vmem:[#allocation8 + $0x60] sm:$0xff] %v438
    %460 = vst [vmem:[#allocation8 + $0x68] sm:$0xff] %v440
    %461 = vst [vmem:[#allocation8 + $0x70] sm:$0xff] %v443
    %462 = vst [vmem:[#allocation8 + $0x78] sm:$0xff] %v445
    // Predicated region
    $region34: #{tpu_custom_call.1} parent=1 // pred_check
      _
    $region35: #{tpu_custom_call.1} parent=1 // pred_check_branch
      %464 = sbr.rel (0) target = $region37
    $region36: #{tpu_custom_call.1} parent=1 // pred_region
      %466 = vsyncadd [#allocation4], 0
      %s467 = sshll.u32 [#allocation8], 4
      %s468 = int_to_ptr.vmem [resolvable:$true] %s467
      %s469 = sshll.u32 %s5, 4
      %s470 = int_to_ptr.hbm [resolvable:$true] %s469
      %475 = dma.vmem_to_hbm [thread:$0]  %s468, 2048, %s470, [#allocation4], 128, 128, 8
    $region37: #{tpu_custom_call.1} parent=1 // pred_fallthru
      _
    // Predicated region
    $region38: #{tpu_custom_call.1} parent=1 // pred_check
      _
    $region39: #{tpu_custom_call.1} parent=1 // pred_check_branch
      %477 = sbr.rel (0) target = $region41
    $region40: #{tpu_custom_call.1} parent=1 // pred_region
      %479 = dma.done [#allocation4], 2048
    $region41: #{tpu_custom_call.1} parent=1 // pred_fallthru
      _
    %480 = vsyncpa [#allocation3], 1
    %481 = vsyncpa [#allocation6], 1
    %482 = vsyncpa [#allocation4], 1

</llo_original>
